<compile_context>
chip_gen: v6e
topology: v6e:2x2x1
jax: 0.10.0
libtpu: 0.0.40
codegen_flags: <defaults>
</compile_context>

<pallas_src>
import functools

import jax
import jax.numpy as jnp
from jax.experimental import pallas as pl
from jax.experimental.pallas import tpu as pltpu

_F32_TINY = 1.1754943508222875e-38  # torch.finfo(torch.float32).tiny (clamp_probs eps)


def _round_up(x, m):
    return ((x + m - 1) // m) * m


def _soft_sub_sampler_kernel(x_ref, z_ref, d_ref, c_ref, *, inv_T, k):
    """x_ref/z_ref/d_ref/c_ref: VMEM (TILE_B, S_pad) float32 tiles."""
    logits = x_ref[...]                                    # (TB, SP) f32
    TB, SP = logits.shape
    iota = jax.lax.broadcasted_iota(jnp.int32, (TB, SP), 1)  # hoisted once

    # ---------------- sample_discrete ----------------
    # k-th largest value per row (== torch.topk(logits, k)[0][..., -1]):
    # knock out exactly one occurrence of the running max, k-1 times.
    # 2 XLU reductions per iteration (row max + first-index min) is the
    # minimum for first-occurrence-exact tie handling.
    vals = logits
    for _ in range(k - 1):
        row_max = jnp.max(vals, axis=-1, keepdims=True)
        is_max = vals == row_max
        first_idx = jnp.min(jnp.where(is_max, iota, SP), axis=-1, keepdims=True)
        vals = jnp.where(iota == first_idx, -jnp.inf, vals)
    threshold = jnp.max(vals, axis=-1, keepdims=True)            # (TB, 1)
    # torch.ge(logits, threshold).float(); padded -inf columns compare False.
    d_ref[...] = (logits >= threshold).astype(jnp.float32)

    # ---------------- sample_continous ----------------
    # continuous_topk over noisy logits: k masked-softmax passes, summed.
    w = logits + z_ref[...]                                # inject_noise
    khot = jnp.zeros_like(w)
    onehot = None
    for it in range(k):
        if it > 0:
            # First iteration skipped: onehot == 0 -> log(clamp(1)) == 0.
            khot_mask = jnp.clip(1.0 - onehot, _F32_TINY, 1.0)   # clamp_probs
            w = w + jnp.log(khot_mask)
        # softmax(w / T): the divide is folded into a VPU multiply by 1/T;
        # subtracting max(w) before scaling is equivalent for T > 0.
        scaled = (w - jnp.max(w, axis=-1, keepdims=True)) * inv_T
        e = jnp.exp(scaled)
        # (TB, 1) reciprocal then a full-tile multiply (cheaper than a full
        # tile divide; plain 1/x is used for interpret-mode portability).
        onehot = e * (1.0 / jnp.sum(e, axis=-1, keepdims=True))
        khot = khot + onehot
    c_ref[...] = khot


def _pick_tile_b(B, S_pad):
    """Rows per grid step, sized for each TPU generation's VMEM budget."""
    try:
        kind = jax.devices()[0].device_kind.lower()
    except Exception:
        kind = ""
    if "v5e" in kind or "v5 lite" in kind or "v5lite" in kind:
        budget = 6 * 1024 * 1024     # v5e: 16 MiB scoped-VMEM default
    elif "v7" in kind:
        budget = 8 * 1024 * 1024     # v7x: only 64 MiB physical VMEM per TC
    else:
        budget = 12 * 1024 * 1024    # v6e / default: 128 MiB physical VMEM
    # 4 tiled arrays x 2 pipeline buffers + ~8 live f32 row intermediates.
    rows = budget // (S_pad * 4 * (2 * 4 + 8))
    rows = max(8, (rows // 8) * 8)   # keep the sublane (8) alignment
    return int(min(rows, _round_up(B, 8), 1024))


def soft_sub_sampler_forward(logits, noise_key, *, T, k, training=True):
    """logits: (B, 1, S) float32 (PyTorch NCL-style). Returns (dsamples, csamples)."""
    B, one, S = logits.shape
    assert one == 1, "SoftSubSampler expects logits of shape (B, 1, S)"
    k = int(k)
    assert 1 <= k <= S

    x = logits.reshape(B, S).astype(jnp.float32)

    # Lane-dense padding: S -> multiple of 128 (pad with -inf), B -> multiple
    # of the batch tile (padded rows are benign zeros, sliced off afterwards).
    S_pad = _round_up(S, 128)
    tile_b = _pick_tile_b(B, S_pad)
    B_pad = _round_up(B, tile_b)
    x_pad = jnp.full((B_pad, S_pad), -jnp.inf, dtype=jnp.float32)
    x_pad = x_pad.at[:B, :S].set(x)
    if B_pad > B:
        x_pad = x_pad.at[B:, :].set(0.0)

    # inject_noise: u ~ U(0,1) clamped (clamp_probs), z = -log(-log(u)).
    # Generated host-side with jax.random; the kernel only adds it to logits.
    # TODO(synk): in-kernel pltpu.prng_* would avoid this HBM pass but has no
    # interpret-mode lowering.
    u = jax.random.uniform(noise_key, (B_pad, S_pad), dtype=jnp.float32)
    u = jnp.clip(u, _F32_TINY, 1.0 - _F32_TINY)
    z = -jnp.log(-jnp.log(u))

    kernel = functools.partial(_soft_sub_sampler_kernel,
                               inv_T=1.0 / float(T), k=k)

    grid = (B_pad // tile_b,)
    row_spec = pl.BlockSpec((tile_b, S_pad), lambda i: (i, 0))
    cost = pl.CostEstimate(
        flops=(10 * k) * B_pad * S_pad,
        transcendentals=(2 * k - 1) * B_pad * S_pad,   # (k-1) log + k exp passes
        bytes_accessed=4 * 4 * B_pad * S_pad,          # 2 inputs + 2 outputs, f32
    )

    dsamples, csamples = pl.pallas_call(
        kernel,
        out_shape=(
            jax.ShapeDtypeStruct((B_pad, S_pad), jnp.float32),
            jax.ShapeDtypeStruct((B_pad, S_pad), jnp.float32),
        ),
        grid=grid,
        in_specs=[row_spec, row_spec],
        out_specs=(row_spec, row_spec),
        compiler_params=pltpu.CompilerParams(
            dimension_semantics=("parallel",),
            vmem_limit_bytes=32 * 1024 * 1024,
        ),
        cost_estimate=cost,
    )(x_pad, z)

    dsamples = dsamples[:B, :S]
    csamples = csamples[:B, :S] if training else None
    return (dsamples, csamples)


if __name__ == "__main__":
    # Deterministic hyper-params (module __init__ args): temperature T, top-k k.
    T = 0.5
    k = 4

    B, S = 4, 16
    key = jax.random.PRNGKey(0)
    logits_key, noise_key = jax.random.split(key)
    logits = jax.random.normal(logits_key, (B, 1, S), dtype=jnp.float32)

    dsamples, csamples = soft_sub_sampler_forward(
        logits, noise_key, T=T, k=k, training=True)
    jax.block_until_ready((dsamples, csamples))

    # Sanity: hard mask selects exactly k per row (no ties in random f32),
    # relaxed mask is a sum of k softmaxes so each row sums to ~k.
    assert dsamples.shape == (B, S) and csamples.shape == (B, S)
    d_row_sums = jnp.sum(dsamples, axis=-1)
    c_row_sums = jnp.sum(csamples, axis=-1)
    assert bool(jnp.all(d_row_sums == k)), d_row_sums
    assert bool(jnp.all(jnp.abs(c_row_sums - k) < 1e-3)), c_row_sums

    print("KERNEL_OK")
</pallas_src>

<mosaic_0001>
module attributes {stable_mosaic.version = 11 : i64} {
  func.func @_soft_sub_sampler_kernel(%arg0: i32, %arg1: memref<8x128xf32, #tpu.memory_space<vmem>>, %arg2: memref<8x128xf32, #tpu.memory_space<vmem>>, %arg3: memref<8x128xf32, #tpu.memory_space<vmem>>, %arg4: memref<8x128xf32, #tpu.memory_space<vmem>>) attributes {dimension_semantics = [#tpu.dimension_semantics<parallel>], iteration_bounds = array<i64: 1>, scalar_prefetch = 0 : i64, scratch_operands = 0 : i64, tpu.core_type = #tpu.core_type<tc>, window_params = [{transform_indices = @transform_0, window_bounds = array<i64: 8, 128>}, {transform_indices = @transform_1, window_bounds = array<i64: 8, 128>}, {transform_indices = @transform_2, window_bounds = array<i64: 8, 128>}, {transform_indices = @transform_3, window_bounds = array<i64: 8, 128>}]} {
    %c0 = arith.constant 0 : index
    %c0_0 = arith.constant 0 : index
    %0 = vector.load %arg1[%c0, %c0_0] : memref<8x128xf32, #tpu.memory_space<vmem>>, vector<8x128xf32>
    %1 = tpu.iota {dimensions = array<i32: 1>} : vector<8x128xi32>
    %cst = arith.constant dense<0xFF800000> : vector<8xf32>
    %2 = vector.multi_reduction <maximumf>, %0, %cst [1] : vector<8x128xf32> to vector<8xf32>
    %3 = vector.shape_cast %2 : vector<8xf32> to vector<8x1xf32>
    %4 = vector.broadcast %3 : vector<8x1xf32> to vector<8x128xf32>
    %5 = arith.cmpf oeq, %0, %4 : vector<8x128xf32>
    %c128_i32 = arith.constant 128 : i32
    %6 = vector.broadcast %c128_i32 : i32 to vector<8x128xi32>
    %7 = arith.select %5, %1, %6 : vector<8x128xi1>, vector<8x128xi32>
    %cst_1 = arith.constant dense<2147483647> : vector<8xi32>
    %8 = vector.multi_reduction <minsi>, %7, %cst_1 [1] : vector<8x128xi32> to vector<8xi32>
    %9 = vector.shape_cast %8 : vector<8xi32> to vector<8x1xi32>
    %10 = vector.broadcast %9 : vector<8x1xi32> to vector<8x128xi32>
    %11 = arith.cmpi eq, %1, %10 : vector<8x128xi32>
    %cst_2 = arith.constant 0xFF800000 : f32
    %12 = vector.broadcast %cst_2 : f32 to vector<8x128xf32>
    %13 = arith.select %11, %12, %0 : vector<8x128xi1>, vector<8x128xf32>
    %cst_3 = arith.constant dense<0xFF800000> : vector<8xf32>
    %14 = vector.multi_reduction <maximumf>, %13, %cst_3 [1] : vector<8x128xf32> to vector<8xf32>
    %15 = vector.shape_cast %14 : vector<8xf32> to vector<8x1xf32>
    %16 = vector.broadcast %15 : vector<8x1xf32> to vector<8x128xf32>
    %17 = arith.cmpf oeq, %13, %16 : vector<8x128xf32>
    %c128_i32_4 = arith.constant 128 : i32
    %18 = vector.broadcast %c128_i32_4 : i32 to vector<8x128xi32>
    %19 = arith.select %17, %1, %18 : vector<8x128xi1>, vector<8x128xi32>
    %cst_5 = arith.constant dense<2147483647> : vector<8xi32>
    %20 = vector.multi_reduction <minsi>, %19, %cst_5 [1] : vector<8x128xi32> to vector<8xi32>
    %21 = vector.shape_cast %20 : vector<8xi32> to vector<8x1xi32>
    %22 = vector.broadcast %21 : vector<8x1xi32> to vector<8x128xi32>
    %23 = arith.cmpi eq, %1, %22 : vector<8x128xi32>
    %cst_6 = arith.constant 0xFF800000 : f32
    %24 = vector.broadcast %cst_6 : f32 to vector<8x128xf32>
    %25 = arith.select %23, %24, %13 : vector<8x128xi1>, vector<8x128xf32>
    %cst_7 = arith.constant dense<0xFF800000> : vector<8xf32>
    %26 = vector.multi_reduction <maximumf>, %25, %cst_7 [1] : vector<8x128xf32> to vector<8xf32>
    %27 = vector.shape_cast %26 : vector<8xf32> to vector<8x1xf32>
    %28 = vector.broadcast %27 : vector<8x1xf32> to vector<8x128xf32>
    %29 = arith.cmpf oeq, %25, %28 : vector<8x128xf32>
    %c128_i32_8 = arith.constant 128 : i32
    %30 = vector.broadcast %c128_i32_8 : i32 to vector<8x128xi32>
    %31 = arith.select %29, %1, %30 : vector<8x128xi1>, vector<8x128xi32>
    %cst_9 = arith.constant dense<2147483647> : vector<8xi32>
    %32 = vector.multi_reduction <minsi>, %31, %cst_9 [1] : vector<8x128xi32> to vector<8xi32>
    %33 = vector.shape_cast %32 : vector<8xi32> to vector<8x1xi32>
    %34 = vector.broadcast %33 : vector<8x1xi32> to vector<8x128xi32>
    %35 = arith.cmpi eq, %1, %34 : vector<8x128xi32>
    %cst_10 = arith.constant 0xFF800000 : f32
    %36 = vector.broadcast %cst_10 : f32 to vector<8x128xf32>
    %37 = arith.select %35, %36, %25 : vector<8x128xi1>, vector<8x128xf32>
    %cst_11 = arith.constant dense<0xFF800000> : vector<8xf32>
    %38 = vector.multi_reduction <maximumf>, %37, %cst_11 [1] : vector<8x128xf32> to vector<8xf32>
    %39 = vector.shape_cast %38 : vector<8xf32> to vector<8x1xf32>
    %40 = vector.broadcast %39 : vector<8x1xf32> to vector<8x128xf32>
    %41 = arith.cmpf oge, %0, %40 : vector<8x128xf32>
    %42 = arith.extui %41 : vector<8x128xi1> to vector<8x128xi32>
    %43 = arith.sitofp %42 : vector<8x128xi32> to vector<8x128xf32>
    %c0_12 = arith.constant 0 : index
    %c0_13 = arith.constant 0 : index
    %44 = vector.load %arg3[%c0_12, %c0_13] : memref<8x128xf32, #tpu.memory_space<vmem>>, vector<8x128xf32>
    tpu.vector_store %arg3[%c0_12, %c0_13], %43 {strides = array<i32>} : memref<8x128xf32, #tpu.memory_space<vmem>>, vector<8x128xf32>,
    %c0_14 = arith.constant 0 : index
    %c0_15 = arith.constant 0 : index
    %45 = vector.load %arg2[%c0_14, %c0_15] : memref<8x128xf32, #tpu.memory_space<vmem>>, vector<8x128xf32>
    %46 = arith.addf %0, %45 : vector<8x128xf32>
    %cst_16 = arith.constant 0.000000e+00 : f32
    %47 = vector.broadcast %cst_16 : f32 to vector<8x128xf32>
    %cst_17 = arith.constant dense<0xFF800000> : vector<8xf32>
    %48 = vector.multi_reduction <maximumf>, %46, %cst_17 [1] : vector<8x128xf32> to vector<8xf32>
    %49 = vector.shape_cast %48 : vector<8xf32> to vector<8x1xf32>
    %50 = vector.broadcast %49 : vector<8x1xf32> to vector<8x128xf32>
    %51 = arith.subf %46, %50 : vector<8x128xf32>
    %cst_18 = arith.constant 2.000000e+00 : f32
    %52 = vector.broadcast %cst_18 : f32 to vector<8x128xf32>
    %53 = arith.mulf %51, %52 : vector<8x128xf32>
    %54 = math.exp %53 : vector<8x128xf32>
    %cst_19 = arith.constant dense<0.000000e+00> : vector<8xf32>
    %55 = vector.multi_reduction <add>, %54, %cst_19 [1] : vector<8x128xf32> to vector<8xf32>
    %56 = vector.shape_cast %55 : vector<8xf32> to vector<8x1xf32>
    %cst_20 = arith.constant 1.000000e+00 : f32
    %57 = vector.broadcast %cst_20 : f32 to vector<8x1xf32>
    %58 = arith.divf %57, %56 : vector<8x1xf32>
    %59 = vector.broadcast %58 : vector<8x1xf32> to vector<8x128xf32>
    %60 = arith.mulf %54, %59 : vector<8x128xf32>
    %61 = arith.addf %47, %60 : vector<8x128xf32>
    %cst_21 = arith.constant 1.000000e+00 : f32
    %62 = vector.broadcast %cst_21 : f32 to vector<8x128xf32>
    %63 = arith.subf %62, %60 : vector<8x128xf32>
    %cst_22 = arith.constant 1.17549435E-38 : f32
    %cst_23 = arith.constant 1.000000e+00 : f32
    %64 = vector.broadcast %cst_22 : f32 to vector<8x128xf32>
    %65 = arith.maximumf %64, %63 : vector<8x128xf32>
    %66 = vector.broadcast %cst_23 : f32 to vector<8x128xf32>
    %67 = arith.minimumf %66, %65 : vector<8x128xf32>
    %68 = math.log %67 : vector<8x128xf32>
    %69 = arith.addf %46, %68 : vector<8x128xf32>
    %cst_24 = arith.constant dense<0xFF800000> : vector<8xf32>
    %70 = vector.multi_reduction <maximumf>, %69, %cst_24 [1] : vector<8x128xf32> to vector<8xf32>
    %71 = vector.shape_cast %70 : vector<8xf32> to vector<8x1xf32>
    %72 = vector.broadcast %71 : vector<8x1xf32> to vector<8x128xf32>
    %73 = arith.subf %69, %72 : vector<8x128xf32>
    %cst_25 = arith.constant 2.000000e+00 : f32
    %74 = vector.broadcast %cst_25 : f32 to vector<8x128xf32>
    %75 = arith.mulf %73, %74 : vector<8x128xf32>
    %76 = math.exp %75 : vector<8x128xf32>
    %cst_26 = arith.constant dense<0.000000e+00> : vector<8xf32>
    %77 = vector.multi_reduction <add>, %76, %cst_26 [1] : vector<8x128xf32> to vector<8xf32>
    %78 = vector.shape_cast %77 : vector<8xf32> to vector<8x1xf32>
    %cst_27 = arith.constant 1.000000e+00 : f32
    %79 = vector.broadcast %cst_27 : f32 to vector<8x1xf32>
    %80 = arith.divf %79, %78 : vector<8x1xf32>
    %81 = vector.broadcast %80 : vector<8x1xf32> to vector<8x128xf32>
    %82 = arith.mulf %76, %81 : vector<8x128xf32>
    %83 = arith.addf %61, %82 : vector<8x128xf32>
    %cst_28 = arith.constant 1.000000e+00 : f32
    %84 = vector.broadcast %cst_28 : f32 to vector<8x128xf32>
    %85 = arith.subf %84, %82 : vector<8x128xf32>
    %cst_29 = arith.constant 1.17549435E-38 : f32
    %cst_30 = arith.constant 1.000000e+00 : f32
    %86 = vector.broadcast %cst_29 : f32 to vector<8x128xf32>
    %87 = arith.maximumf %86, %85 : vector<8x128xf32>
    %88 = vector.broadcast %cst_30 : f32 to vector<8x128xf32>
    %89 = arith.minimumf %88, %87 : vector<8x128xf32>
    %90 = math.log %89 : vector<8x128xf32>
    %91 = arith.addf %69, %90 : vector<8x128xf32>
    %cst_31 = arith.constant dense<0xFF800000> : vector<8xf32>
    %92 = vector.multi_reduction <maximumf>, %91, %cst_31 [1] : vector<8x128xf32> to vector<8xf32>
    %93 = vector.shape_cast %92 : vector<8xf32> to vector<8x1xf32>
    %94 = vector.broadcast %93 : vector<8x1xf32> to vector<8x128xf32>
    %95 = arith.subf %91, %94 : vector<8x128xf32>
    %cst_32 = arith.constant 2.000000e+00 : f32
    %96 = vector.broadcast %cst_32 : f32 to vector<8x128xf32>
    %97 = arith.mulf %95, %96 : vector<8x128xf32>
    %98 = math.exp %97 : vector<8x128xf32>
    %cst_33 = arith.constant dense<0.000000e+00> : vector<8xf32>
    %99 = vector.multi_reduction <add>, %98, %cst_33 [1] : vector<8x128xf32> to vector<8xf32>
    %100 = vector.shape_cast %99 : vector<8xf32> to vector<8x1xf32>
    %cst_34 = arith.constant 1.000000e+00 : f32
    %101 = vector.broadcast %cst_34 : f32 to vector<8x1xf32>
    %102 = arith.divf %101, %100 : vector<8x1xf32>
    %103 = vector.broadcast %102 : vector<8x1xf32> to vector<8x128xf32>
    %104 = arith.mulf %98, %103 : vector<8x128xf32>
    %105 = arith.addf %83, %104 : vector<8x128xf32>
    %cst_35 = arith.constant 1.000000e+00 : f32
    %106 = vector.broadcast %cst_35 : f32 to vector<8x128xf32>
    %107 = arith.subf %106, %104 : vector<8x128xf32>
    %cst_36 = arith.constant 1.17549435E-38 : f32
    %cst_37 = arith.constant 1.000000e+00 : f32
    %108 = vector.broadcast %cst_36 : f32 to vector<8x128xf32>
    %109 = arith.maximumf %108, %107 : vector<8x128xf32>
    %110 = vector.broadcast %cst_37 : f32 to vector<8x128xf32>
    %111 = arith.minimumf %110, %109 : vector<8x128xf32>
    %112 = math.log %111 : vector<8x128xf32>
    %113 = arith.addf %91, %112 : vector<8x128xf32>
    %cst_38 = arith.constant dense<0xFF800000> : vector<8xf32>
    %114 = vector.multi_reduction <maximumf>, %113, %cst_38 [1] : vector<8x128xf32> to vector<8xf32>
    %115 = vector.shape_cast %114 : vector<8xf32> to vector<8x1xf32>
    %116 = vector.broadcast %115 : vector<8x1xf32> to vector<8x128xf32>
    %117 = arith.subf %113, %116 : vector<8x128xf32>
    %cst_39 = arith.constant 2.000000e+00 : f32
    %118 = vector.broadcast %cst_39 : f32 to vector<8x128xf32>
    %119 = arith.mulf %117, %118 : vector<8x128xf32>
    %120 = math.exp %119 : vector<8x128xf32>
    %cst_40 = arith.constant dense<0.000000e+00> : vector<8xf32>
    %121 = vector.multi_reduction <add>, %120, %cst_40 [1] : vector<8x128xf32> to vector<8xf32>
    %122 = vector.shape_cast %121 : vector<8xf32> to vector<8x1xf32>
    %cst_41 = arith.constant 1.000000e+00 : f32
    %123 = vector.broadcast %cst_41 : f32 to vector<8x1xf32>
    %124 = arith.divf %123, %122 : vector<8x1xf32>
    %125 = vector.broadcast %124 : vector<8x1xf32> to vector<8x128xf32>
    %126 = arith.mulf %120, %125 : vector<8x128xf32>
    %127 = arith.addf %105, %126 : vector<8x128xf32>
    %c0_42 = arith.constant 0 : index
    %c0_43 = arith.constant 0 : index
    %128 = vector.load %arg4[%c0_42, %c0_43] : memref<8x128xf32, #tpu.memory_space<vmem>>, vector<8x128xf32>
    tpu.vector_store %arg4[%c0_42, %c0_43], %127 {strides = array<i32>} : memref<8x128xf32, #tpu.memory_space<vmem>>, vector<8x128xf32>,
    return
  }
  func.func @transform_0(%arg0: i32) -> (i32, i32) {
    %c0_i32 = arith.constant 0 : i32
    %c0_i32_0 = arith.constant 0 : i32
    return %arg0, %c0_i32 : i32, i32
  }
  func.func @transform_1(%arg0: i32) -> (i32, i32) {
    %c0_i32 = arith.constant 0 : i32
    %c0_i32_0 = arith.constant 0 : i32
    return %arg0, %c0_i32 : i32, i32
  }
  func.func @transform_2(%arg0: i32) -> (i32, i32) {
    %c0_i32 = arith.constant 0 : i32
    %c0_i32_0 = arith.constant 0 : i32
    return %arg0, %c0_i32 : i32, i32
  }
  func.func @transform_3(%arg0: i32) -> (i32, i32) {
    %c0_i32 = arith.constant 0 : i32
    %c0_i32_0 = arith.constant 0 : i32
    return %arg0, %c0_i32 : i32, i32
  }
}

</mosaic_0001>

<llo_original>
// kernel: tpu_custom_call.1
$region0: #{tpu_custom_call.1}
  #allocation0 [shape = 'u32[]', space=smem, size = 0x4, offset = 0x4, fixed_abs, tag = 'smem constant byte address 0x4 - core index']
  #allocation1 [shape = 'u32[144,128]{1,0:T(1,128)}', space=vmem, size = 0x12000, scoped, tag = 'internal scratch']
  %s0 = inlined_call_operand.hbm [shape: f32[8,128], index: 0, kind: input, shape index: {}]
  %s1 = inlined_call_operand.hbm [shape: f32[8,128], index: 1, kind: input, shape index: {}]
  %s2 = inlined_call_operand.hbm [shape: f32[8,128], index: 2, kind: output, shape index: {0}]
  %s3 = inlined_call_operand.hbm [shape: f32[8,128], index: 3, kind: output, shape index: {1}]
  %4 = xla_tuple %s2, %s3
  %s5 = sld [smem:[#allocation0]]
  $region34: #{tpu_custom_call.1} parent=0
    _
  %s7 = ssub.s32 1, %s5
  %s8 = scalar_select 0, %s7, %s5
  $region1: #{tpu_custom_call.1} parent=0
    #allocation2 [shape = 'u8[4096]{0}', space=vmem, size = 0x1000, scoped, tag = 'input window, operand 0, single buffered']
    #allocation3 [shape = 's32[1]{0}', space=sflag, size = 0x4, scoped, tag = 'scoped memory for tpu_custom_call.1']
    #allocation4 [shape = 's32[1]{0}', space=sflag, size = 0x4, scoped, tag = 'scoped memory for tpu_custom_call.1']
    #allocation5 [shape = 'u8[4096]{0}', space=vmem, size = 0x1000, scoped, tag = 'input window, operand 1, single buffered']
    #allocation6 [shape = 's32[1]{0}', space=sflag, size = 0x4, scoped, tag = 'scoped memory for tpu_custom_call.1']
    #allocation7 [shape = 'u8[4096]{0}', space=vmem, size = 0x1000, scoped, tag = 'output window, operand 0, single buffered']
    #allocation8 [shape = 'u8[4096]{0}', space=vmem, size = 0x1000, scoped, tag = 'output window, operand 1, single buffered']
    #allocation9 [shape = 's32[1]{0}', space=sflag, size = 0x4, scoped, tag = 'scoped memory for tpu_custom_call.1']
    %9 = vsyncpa [#allocation3], 0
    %10 = vsyncpa [#allocation6], 0
    %11 = vsyncpa [#allocation4], 0
    %12 = vsyncpa [#allocation9], 0
    // Predicated region
    $region2: #{tpu_custom_call.1} parent=1 // pred_check
      _
    $region3: #{tpu_custom_call.1} parent=1 // pred_check_branch
      %14 = sbr.rel (0) target = $region5
    $region4: #{tpu_custom_call.1} parent=1 // pred_region
      %s16 = ssub.s32 128, 128
      %17 = vsyncadd [#allocation3], %s16
      %s19 = sshll.u32 [#allocation2], 4
      %s20 = int_to_ptr.vmem [resolvable:$true] %s19
      %22 = dma.hbm_to_vmem [thread:$0]  %s0, 128, %s20, [#allocation3]
    $region5: #{tpu_custom_call.1} parent=1 // pred_fallthru
      _
    // Predicated region
    $region6: #{tpu_custom_call.1} parent=1 // pred_check
      _
    $region7: #{tpu_custom_call.1} parent=1 // pred_check_branch
      %24 = sbr.rel (0) target = $region9
    $region8: #{tpu_custom_call.1} parent=1 // pred_region
      %s26 = ssub.s32 128, 128
      %27 = vsyncadd [#allocation6], %s26
      %s29 = sshll.u32 [#allocation5], 4
      %s30 = int_to_ptr.vmem [resolvable:$true] %s29
      %32 = dma.hbm_to_vmem [thread:$0]  %s1, 128, %s30, [#allocation6]
    $region9: #{tpu_custom_call.1} parent=1 // pred_fallthru
      _
    // Predicated region
    $region10: #{tpu_custom_call.1} parent=1 // pred_check
      _
    $region11: #{tpu_custom_call.1} parent=1 // pred_check_branch
      %34 = sbr.rel (0) target = $region13
    $region12: #{tpu_custom_call.1} parent=1 // pred_region
      %35 = dma.done [#allocation3], 128
    $region13: #{tpu_custom_call.1} parent=1 // pred_fallthru
      _
    // Predicated region
    $region14: #{tpu_custom_call.1} parent=1 // pred_check
      _
    $region15: #{tpu_custom_call.1} parent=1 // pred_check_branch
      %37 = sbr.rel (0) target = $region17
    $region16: #{tpu_custom_call.1} parent=1 // pred_region
      %38 = dma.done [#allocation6], 128
    $region17: #{tpu_custom_call.1} parent=1 // pred_fallthru
      _
    %v39 = vld [vmem:[#allocation2] sm:$0xff]
    %v40 = vlaneseq
    %v41 = vand.u32 %v40, 127
    %42 = vmax.xlane.f32.xlu0 %v39
    %v43 = vpop.xlane.xlu0 %42
    %vm44 = vcmp.eq.f32.partialorder %v39, %v43
    %v45 = vsel %vm44, %v41, 128
    %v46 = vand.u32 %v45, 65535
    %v47 = vshra.s32 %v45, 16
    %v48 = vcvt.s32.f32 %v46
    %v49 = vcvt.s32.f32 %v47
    %50 = vmin.xlane.f32.xlu0 %v49
    %v51 = vpop.xlane.xlu0 %50
    %vm52 = vcmp.eq.f32.partialorder %v49, %v51
    %v53 = vsel %vm52, %v48, inf
    %54 = vmin.xlane.f32.xlu0 %v53
    %v55 = vpop.xlane.xlu0 %54
    %v56 = vcvt.f32.s32 %v55
    %v57 = vcvt.f32.s32 %v51
    %v58 = vshll.u32 %v57, 16
    %v59 = vadd.s32 %v58, %v56
    %vm60 = vcmp.eq.s32.totalorder %v41, %v59
    %v61 = vsel %vm60, -inf, %v39
    %62 = vmax.xlane.f32.xlu0 %v61
    %v63 = vpop.xlane.xlu0 %62
    %vm64 = vcmp.eq.f32.partialorder %v61, %v63
    %v65 = vsel %vm64, %v41, 128
    %v66 = vand.u32 %v65, 65535
    %v67 = vshra.s32 %v65, 16
    %v68 = vcvt.s32.f32 %v66
    %v69 = vcvt.s32.f32 %v67
    %70 = vmin.xlane.f32.xlu0 %v69
    %v71 = vpop.xlane.xlu0 %70
    %vm72 = vcmp.eq.f32.partialorder %v69, %v71
    %v73 = vsel %vm72, %v68, inf
    %74 = vmin.xlane.f32.xlu0 %v73
    %v75 = vpop.xlane.xlu0 %74
    %v76 = vcvt.f32.s32 %v75
    %v77 = vcvt.f32.s32 %v71
    %v78 = vshll.u32 %v77, 16
    %v79 = vadd.s32 %v78, %v76
    %vm80 = vcmp.eq.s32.totalorder %v41, %v79
    %v81 = vsel %vm80, -inf, %v61
    %82 = vmax.xlane.f32.xlu0 %v81
    %v83 = vpop.xlane.xlu0 %82
    %vm84 = vcmp.eq.f32.partialorder %v81, %v83
    %v85 = vsel %vm84, %v41, 128
    %v86 = vand.u32 %v85, 65535
    %v87 = vshra.s32 %v85, 16
    %v88 = vcvt.s32.f32 %v86
    %v89 = vcvt.s32.f32 %v87
    %90 = vmin.xlane.f32.xlu0 %v89
    %v91 = vpop.xlane.xlu0 %90
    %vm92 = vcmp.eq.f32.partialorder %v89, %v91
    %v93 = vsel %vm92, %v88, inf
    %94 = vmin.xlane.f32.xlu0 %v93
    %v95 = vpop.xlane.xlu0 %94
    %v96 = vcvt.f32.s32 %v95
    %v97 = vcvt.f32.s32 %v91
    %v98 = vshll.u32 %v97, 16
    %v99 = vadd.s32 %v98, %v96
    %vm100 = vcmp.eq.s32.totalorder %v41, %v99
    %v101 = vsel %vm100, -inf, %v81
    %102 = vmax.xlane.f32.xlu0 %v101
    %v103 = vpop.xlane.xlu0 %102
    %vm104 = vcmp.ge.f32.partialorder %v39, %v103
    %v105 = vsel %vm104, 1, 0
    %v106 = vcvt.s32.f32 %v105
    %107 = vst [vmem:[#allocation7] sm:$0xff] %v106
    %v108 = vld [vmem:[#allocation5] sm:$0xff]
    %v109 = vadd.f32 %v39, %v108
    %110 = vmax.xlane.f32.xlu0 %v109
    %v111 = vpop.xlane.xlu0 %110
    %v112 = vsub.f32 %v109, %v111
    %v113 = vmul.f32 %v112, 2.0
    %v114 = vmul.f32 %v113, 1.442695
    %v115 = vpow.pop %v114
    %116 = vadd.xlane.f32.xlu0 %v115
    %v117 = vpop.xlane.xlu0 %116
    %v118 = vrcp.pop %v117
    %v119 = vmul.f32 1.0, %v118
    %v120 = vmul.f32 %v115, %v119
    %v121 = vadd.f32 %v120, 0.0
    %v122 = vsub.f32 1.0, %v120
    %v123 = vmax.f32 %v122, 1.1754944e-38
    %v124 = vmin.f32 %v123, 1.0
    %v125 = vlog2.pop %v124
    %v126 = vmul.f32 %v125, 0.6931472
    %v127 = vadd.f32 %v109, %v126
    %128 = vmax.xlane.f32.xlu0 %v127
    %v129 = vpop.xlane.xlu0 %128
    %v130 = vsub.f32 %v127, %v129
    %v131 = vmul.f32 %v130, 2.0
    %v132 = vmul.f32 %v131, 1.442695
    %v133 = vpow.pop %v132
    %134 = vadd.xlane.f32.xlu0 %v133
    %v135 = vpop.xlane.xlu0 %134
    %v136 = vrcp.pop %v135
    %v137 = vmul.f32 1.0, %v136
    %v138 = vmul.f32 %v133, %v137
    %v139 = vadd.f32 %v121, %v138
    %v140 = vsub.f32 1.0, %v138
    %v141 = vmax.f32 %v140, 1.1754944e-38
    %v142 = vmin.f32 %v141, 1.0
    %v143 = vlog2.pop %v142
    %v144 = vmul.f32 %v143, 0.6931472
    %v145 = vadd.f32 %v127, %v144
    %146 = vmax.xlane.f32.xlu0 %v145
    %v147 = vpop.xlane.xlu0 %146
    %v148 = vsub.f32 %v145, %v147
    %v149 = vmul.f32 %v148, 2.0
    %v150 = vmul.f32 %v149, 1.442695
    %v151 = vpow.pop %v150
    %152 = vadd.xlane.f32.xlu0 %v151
    %v153 = vpop.xlane.xlu0 %152
    %v154 = vrcp.pop %v153
    %v155 = vmul.f32 1.0, %v154
    %v156 = vmul.f32 %v151, %v155
    %v157 = vadd.f32 %v139, %v156
    %v158 = vsub.f32 1.0, %v156
    %v159 = vmax.f32 %v158, 1.1754944e-38
    %v160 = vmin.f32 %v159, 1.0
    %v161 = vlog2.pop %v160
    %v162 = vmul.f32 %v161, 0.6931472
    %v163 = vadd.f32 %v145, %v162
    %164 = vmax.xlane.f32.xlu0 %v163
    %v165 = vpop.xlane.xlu0 %164
    %v166 = vsub.f32 %v163, %v165
    %v167 = vmul.f32 %v166, 2.0
    %v168 = vmul.f32 %v167, 1.442695
    %v169 = vpow.pop %v168
    %170 = vadd.xlane.f32.xlu0 %v169
    %v171 = vpop.xlane.xlu0 %170
    %v172 = vrcp.pop %v171
    %v173 = vmul.f32 1.0, %v172
    %v174 = vmul.f32 %v169, %v173
    %v175 = vadd.f32 %v157, %v174
    %176 = vst [vmem:[#allocation8] sm:$0xff] %v175
    // Predicated region
    $region18: #{tpu_custom_call.1} parent=1 // pred_check
      _
    $region19: #{tpu_custom_call.1} parent=1 // pred_check_branch
      %178 = sbr.rel (0) target = $region21
    $region20: #{tpu_custom_call.1} parent=1 // pred_region
      %s180 = ssub.s32 128, 128
      %181 = vsyncadd [#allocation4], %s180
      %s183 = sshll.u32 [#allocation7], 4
      %s184 = int_to_ptr.vmem [resolvable:$true] %s183
      %186 = dma.vmem_to_hbm [thread:$0]  %s184, 128, %s2, [#allocation4]
    $region21: #{tpu_custom_call.1} parent=1 // pred_fallthru
      _
    // Predicated region
    $region22: #{tpu_custom_call.1} parent=1 // pred_check
      _
    $region23: #{tpu_custom_call.1} parent=1 // pred_check_branch
      %188 = sbr.rel (0) target = $region25
    $region24: #{tpu_custom_call.1} parent=1 // pred_region
      %s190 = ssub.s32 128, 128
      %191 = vsyncadd [#allocation9], %s190
      %s193 = sshll.u32 [#allocation8], 4
      %s194 = int_to_ptr.vmem [resolvable:$true] %s193
      %196 = dma.vmem_to_hbm [thread:$0]  %s194, 128, %s3, [#allocation9]
    $region25: #{tpu_custom_call.1} parent=1 // pred_fallthru
      _
    // Predicated region
    $region26: #{tpu_custom_call.1} parent=1 // pred_check
      _
    $region27: #{tpu_custom_call.1} parent=1 // pred_check_branch
      %198 = sbr.rel (0) target = $region29
    $region28: #{tpu_custom_call.1} parent=1 // pred_region
      %199 = dma.done [#allocation4], 128
    $region29: #{tpu_custom_call.1} parent=1 // pred_fallthru
      _
    // Predicated region
    $region30: #{tpu_custom_call.1} parent=1 // pred_check
      _
    $region31: #{tpu_custom_call.1} parent=1 // pred_check_branch
      %201 = sbr.rel (0) target = $region33
    $region32: #{tpu_custom_call.1} parent=1 // pred_region
      %202 = dma.done [#allocation9], 128
    $region33: #{tpu_custom_call.1} parent=1 // pred_fallthru
      _
    %203 = vsyncpa [#allocation3], 1
    %204 = vsyncpa [#allocation6], 1
    %205 = vsyncpa [#allocation4], 1
    %206 = vsyncpa [#allocation9], 1

</llo_original>
